<compile_context>
chip_gen: v7x
topology: tpu7x:2x2x1
jax: 0.10.0
libtpu: 0.0.40
codegen_flags: <defaults>
</compile_context>

<pallas_src>
import functools

import jax
import jax.numpy as jnp
import numpy as np
from jax.experimental import pallas as pl
from jax.experimental.pallas import tpu as pltpu

_VMEM_LIMIT = 32 * 1024 * 1024


def _round_up(x, m):
    return (x + m - 1) // m * m


def _pad_rows(a, p_pad):
    p = a.shape[0]
    if p == p_pad:
        return a
    return jnp.pad(a, ((0, p_pad - p), (0, 0)))


# ------------- pass A: 3x3 conv (+ fused 1x1 shortcut conv) + BN statistics -------------

def _conv_stats_kernel(cin, fuse_shortcut, xc_ref, w_ref, *rest):
    """One K=9*Cin matmul per tile (+ optional fused 1x1 shortcut matmul) + stats."""
    if fuse_shortcut:
        ws_ref, h_ref, hs_ref, sum_ref, sq_ref, ssum_ref, ssq_ref = rest
    else:
        h_ref, sum_ref, sq_ref = rest

    xc = xc_ref[...]
    y = jnp.dot(xc, w_ref[...], preferred_element_type=jnp.float32)
    h_ref[...] = y.astype(h_ref.dtype)

    @pl.when(pl.program_id(0) == 0)
    def _():
        sum_ref[...] = jnp.zeros_like(sum_ref)
        sq_ref[...] = jnp.zeros_like(sq_ref)
        if fuse_shortcut:
            ssum_ref[...] = jnp.zeros_like(ssum_ref)
            ssq_ref[...] = jnp.zeros_like(ssq_ref)

    sum_ref[...] += jnp.sum(y, axis=0, keepdims=True)
    sq_ref[...] += jnp.sum(y * y, axis=0, keepdims=True)

    if fuse_shortcut:
        # Center tap (kh=1, kw=1) of the 3x3/pad-1 im2col == the 1x1/stride-s conv input.
        xs = xc[:, 4 * cin:5 * cin]
        ys = jnp.dot(xs, ws_ref[...], preferred_element_type=jnp.float32)
        hs_ref[...] = ys.astype(hs_ref.dtype)
        ssum_ref[...] += jnp.sum(ys, axis=0, keepdims=True)
        ssq_ref[...] += jnp.sum(ys * ys, axis=0, keepdims=True)


def conv_stats(xc_pad, w, *, tile_p, ws=None):
    """xc_pad: (P_pad, 9*Cin) bf16 im2col; w: (9*Cin, Cout) bf16; ws: (Cin, Cout) or None.

    Returns (h, sum, sumsq) or, with fused shortcut, (h, hs, sum, sumsq, ssum, ssumsq).
    """
    p_pad, k = xc_pad.shape
    cout = w.shape[1]
    grid_n = p_pad // tile_p
    fuse = ws is not None
    cin = k // 9

    in_specs = [
        pl.BlockSpec((tile_p, k), lambda i: (i, 0)),
        pl.BlockSpec((k, cout), lambda i: (0, 0)),        # weights stay resident
    ]
    inputs = [xc_pad, w]
    if fuse:
        in_specs.append(pl.BlockSpec(ws.shape, lambda i: (0, 0)))
        inputs.append(ws)

    tile_out = pl.BlockSpec((tile_p, cout), lambda i: (i, 0))
    stat_out = pl.BlockSpec((1, cout), lambda i: (0, 0))   # accumulated across the grid
    h_out = jax.ShapeDtypeStruct((p_pad, cout), jnp.bfloat16)
    s_out = jax.ShapeDtypeStruct((1, cout), jnp.float32)

    if fuse:
        out_specs = (tile_out, tile_out, stat_out, stat_out, stat_out, stat_out)
        out_shape = (h_out, h_out, s_out, s_out, s_out, s_out)
        flops = 2 * p_pad * (k + cin) * cout
    else:
        out_specs = (tile_out, stat_out, stat_out)
        out_shape = (h_out, s_out, s_out)
        flops = 2 * p_pad * k * cout

    bytes_acc = (p_pad * k * 2 + k * cout * 2
                 + (2 if fuse else 1) * p_pad * cout * 2 + 8 * cout * 4)

    return pl.pallas_call(
        functools.partial(_conv_stats_kernel, cin, fuse),
        grid=(grid_n,),
        in_specs=in_specs,
        out_specs=out_specs,
        out_shape=out_shape,
        compiler_params=pltpu.CompilerParams(
            dimension_semantics=("arbitrary",),
            vmem_limit_bytes=_VMEM_LIMIT),
        cost_estimate=pl.CostEstimate(flops=flops, transcendentals=0,
                                      bytes_accessed=bytes_acc),
    )(*inputs)


# --------------------- pass B: BatchNorm + residual + ReLU (tiled) ---------------------

def _bn_act_kernel(inv_count, eps, apply_relu, res_mode, *refs):
    """res_mode: 0 = no residual, 1 = raw residual, 2 = residual with its own BN."""
    if res_mode == 0:
        h_ref, s_ref, q_ref, g_ref, b_ref, out_ref = refs
    elif res_mode == 1:
        h_ref, s_ref, q_ref, g_ref, b_ref, res_ref, out_ref = refs
    else:
        (h_ref, s_ref, q_ref, g_ref, b_ref, res_ref,
         rs_ref, rq_ref, rg_ref, rb_ref, out_ref) = refs

    mean = s_ref[...] * inv_count
    var = q_ref[...] * inv_count - mean * mean
    scale = g_ref[...] * jax.lax.rsqrt(var + eps)
    shift = b_ref[...] - mean * scale
    y = h_ref[...].astype(jnp.float32) * scale + shift

    if res_mode == 1:
        y = y + res_ref[...].astype(jnp.float32)
    elif res_mode == 2:
        rmean = rs_ref[...] * inv_count
        rvar = rq_ref[...] * inv_count - rmean * rmean
        rscale = rg_ref[...] * jax.lax.rsqrt(rvar + eps)
        rshift = rb_ref[...] - rmean * rscale
        y = y + res_ref[...].astype(jnp.float32) * rscale + rshift

    if apply_relu:
        y = jnp.maximum(y, 0.0)
    out_ref[...] = y.astype(out_ref.dtype)


def bn_act(h, s, q, gamma, beta, count, *, tile_p, relu, eps,
           residual=None, res_s=None, res_q=None, res_gamma=None, res_beta=None,
           out_dtype=jnp.float32):
    p_pad, cout = h.shape
    grid_n = p_pad // tile_p
    g2 = gamma.reshape(1, cout).astype(jnp.float32)
    b2 = beta.reshape(1, cout).astype(jnp.float32)

    if residual is None:
        mode = 0
        inputs = [h, s, q, g2, b2]
    elif res_s is None:
        mode = 1
        inputs = [h, s, q, g2, b2, residual]
    else:
        mode = 2
        inputs = [h, s, q, g2, b2, residual, res_s, res_q,
                  res_gamma.reshape(1, cout).astype(jnp.float32),
                  res_beta.reshape(1, cout).astype(jnp.float32)]

    def spec(a):
        if a.shape[0] == p_pad:
            return pl.BlockSpec((tile_p, a.shape[1]), lambda i: (i, 0))
        return pl.BlockSpec(a.shape, lambda i: (0, 0))        # small residents

    bytes_moved = sum(int(np.prod(a.shape)) * a.dtype.itemsize for a in inputs)
    bytes_moved += p_pad * cout * jnp.dtype(out_dtype).itemsize
    kernel = functools.partial(_bn_act_kernel, 1.0 / count, eps, relu, mode)

    return pl.pallas_call(
        kernel,
        grid=(grid_n,),
        in_specs=[spec(a) for a in inputs],
        out_specs=pl.BlockSpec((tile_p, cout), lambda i: (i, 0)),
        out_shape=jax.ShapeDtypeStruct((p_pad, cout), out_dtype),
        compiler_params=pltpu.CompilerParams(
            dimension_semantics=("parallel",),
            vmem_limit_bytes=_VMEM_LIMIT),
        cost_estimate=pl.CostEstimate(flops=12 * p_pad * cout, transcendentals=2 * cout,
                                      bytes_accessed=bytes_moved),
    )(*inputs)


# --------------------------------- im2col glue (JAX) ---------------------------------

def _im2col(x_nhwc, ksize, stride, pad):
    """(N,H,W,C) -> (N*Ho*Wo, ksize*ksize*C): taps concatenated on the lane axis."""
    n, h, w, c = x_nhwc.shape
    if pad:
        x_nhwc = jnp.pad(x_nhwc, ((0, 0), (pad, pad), (pad, pad), (0, 0)))
    hp, wp = h + 2 * pad, w + 2 * pad
    ho = (hp - ksize) // stride + 1
    wo = (wp - ksize) // stride + 1
    cols = []
    for kh in range(ksize):
        for kw in range(ksize):
            patch = jax.lax.slice(
                x_nhwc,
                (0, kh, kw, 0),
                (n, kh + (ho - 1) * stride + 1, kw + (wo - 1) * stride + 1, c),
                (1, stride, stride, 1))
            cols.append(patch.reshape(n * ho * wo, c))
    return jnp.concatenate(cols, axis=1), (n, ho, wo)


# ------------------------------------ BasicBlock ------------------------------------

def init_basic_block_params(key, in_planes, planes, stride):
    """Shapes mirror nn.Conv2d / nn.BatchNorm2d in BasicBlock.__init__ (HWIO weights)."""
    ks = jax.random.split(key, 8)
    params = {
        "w1": 0.1 * jax.random.normal(ks[0], (3, 3, in_planes, planes), jnp.float32),
        "g1": 1.0 + 0.1 * jax.random.normal(ks[1], (planes,), jnp.float32),
        "b1": 0.1 * jax.random.normal(ks[2], (planes,), jnp.float32),
        "w2": 0.1 * jax.random.normal(ks[3], (3, 3, planes, planes), jnp.float32),
        "g2": 1.0 + 0.1 * jax.random.normal(ks[4], (planes,), jnp.float32),
        "b2": 0.1 * jax.random.normal(ks[5], (planes,), jnp.float32),
    }
    if stride != 1 or in_planes != planes:
        params["ws"] = 0.1 * jax.random.normal(ks[6], (1, 1, in_planes, planes), jnp.float32)
        params["gs"] = 1.0 + 0.05 * jax.random.normal(ks[7], (planes,), jnp.float32)
        params["bs"] = jnp.zeros((planes,), jnp.float32)
    return params


def basic_block_forward(x_nchw, params, stride, eps=1e-5, tile_p=512):
    """Pallas-backed BasicBlock.forward. Input/output NCHW, like the PyTorch module."""
    x = jnp.transpose(x_nchw, (0, 2, 3, 1)).astype(jnp.float32)   # NHWC, f32
    n, h, w, cin = x.shape
    planes = params["w1"].shape[-1]
    x_bf = x.astype(jnp.bfloat16)

    # ---- conv1 (3x3, stride), fused with the 1x1 projection shortcut if present ----
    xc1, (_, ho, wo) = _im2col(x_bf, 3, stride, 1)
    p = n * ho * wo
    tp = min(tile_p, _round_up(p, 8))
    p_pad = _round_up(p, tp)
    xc1 = _pad_rows(xc1, p_pad)

    w1 = params["w1"].reshape(9 * cin, planes).astype(jnp.bfloat16)
    downsample = (stride != 1) or (cin != planes)
    if downsample:
        ws = params["ws"].reshape(cin, planes).astype(jnp.bfloat16)
        h1, res, s1, q1, rs, rq = conv_stats(xc1, w1, tile_p=tp, ws=ws)
        rg, rb = params["gs"], params["bs"]
    else:
        h1, s1, q1 = conv_stats(xc1, w1, tile_p=tp)
        res = _pad_rows(x_bf.reshape(n * h * w, cin), p_pad)       # identity residual
        rs = rq = rg = rb = None

    y1 = bn_act(h1, s1, q1, params["g1"], params["b1"], p,
                tile_p=tp, relu=True, eps=eps, out_dtype=jnp.bfloat16)

    # ---- conv2 (3x3, stride 1) + bn2 + residual + relu ----
    y1_img = y1[:p].reshape(n, ho, wo, planes)
    yc2, _ = _im2col(y1_img, 3, 1, 1)
    w2 = params["w2"].reshape(9 * planes, planes).astype(jnp.bfloat16)
    h2, s2, q2 = conv_stats(_pad_rows(yc2, p_pad), w2, tile_p=tp)
    out = bn_act(h2, s2, q2, params["g2"], params["b2"], p,
                 tile_p=tp, relu=True, eps=eps,
                 residual=res, res_s=rs, res_q=rq, res_gamma=rg, res_beta=rb)

    out = out[:p].reshape(n, ho, wo, planes)
    return jnp.transpose(out, (0, 3, 1, 2))                        # NCHW


# -------------------- pure-JAX reference (for correctness check) --------------------

def _ref_bn_train(y, g, b, eps=1e-5):
    m = jnp.mean(y, axis=(0, 1, 2), keepdims=True)
    v = jnp.mean(jnp.square(y - m), axis=(0, 1, 2), keepdims=True)
    return (y - m) * jax.lax.rsqrt(v + eps) * g.reshape(1, 1, 1, -1) + b.reshape(1, 1, 1, -1)


def ref_basic_block(x_nchw, params, stride, eps=1e-5):
    x = jnp.transpose(x_nchw, (0, 2, 3, 1)).astype(jnp.float32)
    cin = x.shape[-1]
    planes = params["w1"].shape[-1]

    def conv(inp, wgt, s, pad):
        return jax.lax.conv_general_dilated(
            inp, wgt, window_strides=(s, s), padding=((pad, pad), (pad, pad)),
            dimension_numbers=("NHWC", "HWIO", "NHWC"))

    out = jax.nn.relu(_ref_bn_train(conv(x, params["w1"], stride, 1),
                                    params["g1"], params["b1"], eps))
    out = _ref_bn_train(conv(out, params["w2"], 1, 1), params["g2"], params["b2"], eps)
    if stride != 1 or cin != planes:
        sc = _ref_bn_train(conv(x, params["ws"], stride, 0),
                           params["gs"], params["bs"], eps)
    else:
        sc = x
    out = jax.nn.relu(out + sc)
    return jnp.transpose(out, (0, 3, 1, 2))


if __name__ == "__main__":
    key = jax.random.PRNGKey(0)
    kx1, kp1, kx2, kp2 = jax.random.split(key, 4)

    # Case 1: identity shortcut (stride=1, in_planes == planes); P=512 -> 4 tiles of 128.
    x1 = jax.random.normal(kx1, (2, 8, 16, 16), jnp.float32)     # NCHW
    p1 = init_basic_block_params(kp1, 8, 8, 1)
    out1 = jax.block_until_ready(basic_block_forward(x1, p1, 1, tile_p=128))
    assert out1.shape == (2, 8, 16, 16)
    ref1 = jax.block_until_ready(ref_basic_block(x1, p1, 1))

    # Case 2: downsample shortcut (stride=2, in_planes != planes); P=128 -> 1 tile.
    x2 = jax.random.normal(kx2, (2, 4, 16, 16), jnp.float32)     # NCHW
    p2 = init_basic_block_params(kp2, 4, 8, 2)
    out2 = jax.block_until_ready(basic_block_forward(x2, p2, 2, tile_p=128))
    assert out2.shape == (2, 8, 8, 8)
    ref2 = jax.block_until_ready(ref_basic_block(x2, p2, 2))

    # bf16 MXU operands + bf16 intermediates vs f32 reference -> loosened tolerance
    # (BatchNorm renormalizes most of the rounding error).
    np.testing.assert_allclose(np.asarray(out1), np.asarray(ref1), rtol=2.5e-2, atol=2.5e-2)
    np.testing.assert_allclose(np.asarray(out2), np.asarray(ref2), rtol=2.5e-2, atol=2.5e-2)
    print("KERNEL_OK")
</pallas_src>

<mosaic_0001>
module attributes {stable_mosaic.version = 11 : i64} {
  func.func @_conv_stats_kernel(%arg0: i32, %arg1: memref<128x72xbf16, #tpu.memory_space<vmem>>, %arg2: memref<72x8xbf16, #tpu.memory_space<vmem>>, %arg3: memref<128x8xbf16, #tpu.memory_space<vmem>>, %arg4: memref<1x8xf32, #tpu.memory_space<vmem>>, %arg5: memref<1x8xf32, #tpu.memory_space<vmem>>) attributes {dimension_semantics = [#tpu.dimension_semantics<arbitrary>], iteration_bounds = array<i64: 4>, scalar_prefetch = 0 : i64, scratch_operands = 0 : i64, tpu.core_type = #tpu.core_type<tc>, window_params = [{transform_indices = @transform_0, window_bounds = array<i64: 128, 72>}, {pipeline_mode = #tpu.pipeline_mode<synchronous>, transform_indices = @transform_1, window_bounds = array<i64: 72, 8>}, {transform_indices = @transform_2, window_bounds = array<i64: 128, 8>}, {pipeline_mode = #tpu.pipeline_mode<synchronous>, transform_indices = @transform_3, window_bounds = array<i64: 1, 8>}, {pipeline_mode = #tpu.pipeline_mode<synchronous>, transform_indices = @transform_4, window_bounds = array<i64: 1, 8>}]} {
    %c0 = arith.constant 0 : index
    %c0_0 = arith.constant 0 : index
    %0 = vector.load %arg1[%c0, %c0_0] : memref<128x72xbf16, #tpu.memory_space<vmem>>, vector<128x72xbf16>
    %c0_1 = arith.constant 0 : index
    %c0_2 = arith.constant 0 : index
    %1 = vector.load %arg2[%c0_1, %c0_2] : memref<72x8xbf16, #tpu.memory_space<vmem>>, vector<72x8xbf16>
    %cst = arith.constant dense<0.000000e+00> : vector<128x8xf32>
    %2 = tpu.matmul %0, %1, %cst {dimension_numbers = #tpu.dot_dimension_numbers<[1], [0], [0], [1], [0, 0, 1, 1], [], []>} : vector<128x72xbf16>, vector<72x8xbf16>, vector<128x8xf32> -> vector<128x8xf32>
    %3 = arith.truncf %2 : vector<128x8xf32> to vector<128x8xbf16>
    %c0_3 = arith.constant 0 : index
    %c0_4 = arith.constant 0 : index
    %4 = vector.load %arg3[%c0_3, %c0_4] : memref<128x8xbf16, #tpu.memory_space<vmem>>, vector<128x8xbf16>
    tpu.vector_store %arg3[%c0_3, %c0_4], %3 {strides = array<i32>} : memref<128x8xbf16, #tpu.memory_space<vmem>>, vector<128x8xbf16>,
    %c0_i32 = arith.constant 0 : i32
    %5 = arith.cmpi eq, %arg0, %c0_i32 : i32
    %6 = arith.extui %5 : i1 to i32
    %c0_i32_5 = arith.constant 0 : i32
    %7 = arith.cmpi ne, %6, %c0_i32_5 : i32
    scf.if %7 {
      %cst_16 = arith.constant 0.000000e+00 : f32
      %19 = vector.broadcast %cst_16 : f32 to vector<1x8xf32>
      %c0_17 = arith.constant 0 : index
      %c0_18 = arith.constant 0 : index
      %20 = vector.load %arg4[%c0_17, %c0_18] : memref<1x8xf32, #tpu.memory_space<vmem>>, vector<1x8xf32>
      tpu.vector_store %arg4[%c0_17, %c0_18], %19 {strides = array<i32>} : memref<1x8xf32, #tpu.memory_space<vmem>>, vector<1x8xf32>,
      %cst_19 = arith.constant 0.000000e+00 : f32
      %21 = vector.broadcast %cst_19 : f32 to vector<1x8xf32>
      %c0_20 = arith.constant 0 : index
      %c0_21 = arith.constant 0 : index
      %22 = vector.load %arg5[%c0_20, %c0_21] : memref<1x8xf32, #tpu.memory_space<vmem>>, vector<1x8xf32>
      tpu.vector_store %arg5[%c0_20, %c0_21], %21 {strides = array<i32>} : memref<1x8xf32, #tpu.memory_space<vmem>>, vector<1x8xf32>,
    } else {
    }
    %c0_6 = arith.constant 0 : index
    %c0_7 = arith.constant 0 : index
    %8 = vector.load %arg4[%c0_6, %c0_7] : memref<1x8xf32, #tpu.memory_space<vmem>>, vector<1x8xf32>
    %cst_8 = arith.constant dense<0.000000e+00> : vector<8xf32>
    %9 = vector.multi_reduction <add>, %2, %cst_8 [0] : vector<128x8xf32> to vector<8xf32>
    %10 = vector.shape_cast %9 : vector<8xf32> to vector<1x8xf32>
    %11 = arith.addf %8, %10 : vector<1x8xf32>
    %c0_9 = arith.constant 0 : index
    %c0_10 = arith.constant 0 : index
    %12 = vector.load %arg4[%c0_9, %c0_10] : memref<1x8xf32, #tpu.memory_space<vmem>>, vector<1x8xf32>
    tpu.vector_store %arg4[%c0_9, %c0_10], %11 {strides = array<i32>} : memref<1x8xf32, #tpu.memory_space<vmem>>, vector<1x8xf32>,
    %c0_11 = arith.constant 0 : index
    %c0_12 = arith.constant 0 : index
    %13 = vector.load %arg5[%c0_11, %c0_12] : memref<1x8xf32, #tpu.memory_space<vmem>>, vector<1x8xf32>
    %14 = arith.mulf %2, %2 : vector<128x8xf32>
    %cst_13 = arith.constant dense<0.000000e+00> : vector<8xf32>
    %15 = vector.multi_reduction <add>, %14, %cst_13 [0] : vector<128x8xf32> to vector<8xf32>
    %16 = vector.shape_cast %15 : vector<8xf32> to vector<1x8xf32>
    %17 = arith.addf %13, %16 : vector<1x8xf32>
    %c0_14 = arith.constant 0 : index
    %c0_15 = arith.constant 0 : index
    %18 = vector.load %arg5[%c0_14, %c0_15] : memref<1x8xf32, #tpu.memory_space<vmem>>, vector<1x8xf32>
    tpu.vector_store %arg5[%c0_14, %c0_15], %17 {strides = array<i32>} : memref<1x8xf32, #tpu.memory_space<vmem>>, vector<1x8xf32>,
    return
  }
  func.func @transform_0(%arg0: i32) -> (i32, i32) {
    %c0_i32 = arith.constant 0 : i32
    %c0_i32_0 = arith.constant 0 : i32
    return %arg0, %c0_i32 : i32, i32
  }
  func.func @transform_1(%arg0: i32) -> (i32, i32) {
    %c0_i32 = arith.constant 0 : i32
    %c0_i32_0 = arith.constant 0 : i32
    %c0_i32_1 = arith.constant 0 : i32
    return %c0_i32, %c0_i32_0 : i32, i32
  }
  func.func @transform_2(%arg0: i32) -> (i32, i32) {
    %c0_i32 = arith.constant 0 : i32
    %c0_i32_0 = arith.constant 0 : i32
    return %arg0, %c0_i32 : i32, i32
  }
  func.func @transform_3(%arg0: i32) -> (i32, i32) {
    %c0_i32 = arith.constant 0 : i32
    %c0_i32_0 = arith.constant 0 : i32
    %c0_i32_1 = arith.constant 0 : i32
    return %c0_i32, %c0_i32_0 : i32, i32
  }
  func.func @transform_4(%arg0: i32) -> (i32, i32) {
    %c0_i32 = arith.constant 0 : i32
    %c0_i32_0 = arith.constant 0 : i32
    %c0_i32_1 = arith.constant 0 : i32
    return %c0_i32, %c0_i32_0 : i32, i32
  }
}

</mosaic_0001>

<llo_original>
// kernel: tpu_custom_call.1
$region0: #{tpu_custom_call.1}
  #allocation0 [shape = 'u32[]', space=smem, size = 0x4, offset = 0x4, fixed_abs, tag = 'smem constant byte address 0x4 - core index']
  #allocation1 [shape = 'u32[144,128]{1,0:T(1,128)}', space=vmem, size = 0x12000, scoped, tag = 'internal scratch']
  %s0 = inlined_call_operand.vmem [shape: bf16[512,72], index: 0, kind: input, shape index: {}]
  %s1 = inlined_call_operand.vmem [shape: bf16[72,8], index: 1, kind: input, shape index: {}]
  %s2 = inlined_call_operand.vmem [shape: bf16[512,8], index: 2, kind: output, shape index: {0}]
  %s3 = inlined_call_operand.hbm [shape: f32[1,8], index: 3, kind: output, shape index: {1}]
  %s4 = inlined_call_operand.hbm [shape: f32[1,8], index: 4, kind: output, shape index: {2}]
  %5 = xla_tuple %s2, %s3, %s4
  %s6 = sld [smem:[#allocation0]]
  $region61: #{tpu_custom_call.1} parent=0
    _
  %s8 = ssub.s32 1, %s6
  %s9 = scalar_select 0, %s8, %s6
  $region1: #{tpu_custom_call.1} parent=0
    #allocation2 [shape = 'u8[512]{0}', space=vmem, size = 0x400, scoped, tag = 'output window, operand 1, single buffered']
    #allocation3 [shape = 's32[2]{0}', space=sflag, size = 0x8, scoped, tag = 'scoped memory for tpu_custom_call.1']
    #allocation4 [shape = 'u8[512]{0}', space=vmem, size = 0x400, scoped, tag = 'output window, operand 2, single buffered']
    #allocation5 [shape = 's32[1]{0}', space=sflag, size = 0x4, scoped, tag = 'scoped memory for tpu_custom_call.1']
    %10 = vsyncpa [#allocation3], 0
    %11 = vsyncpa [#allocation5], 0
    loop: start=0, step=1, limit=6
    $region2: #{tpu_custom_call.1} parent=1 // loop_pre_header
      _
    $region3: #{tpu_custom_call.1} parent=1 // loop_header
      %s13 = sphi 0, %s17
      %p14 = scmp.ge.s32.totalorder %s13, 6
      %s23 = sphi 0, %s25
      %s26 = sphi 0, %s23
      %s27 = sphi 0, %s26
      %s43 = sphi 0, %s27
      %s47 = sphi 0, %s47
      %s49 = sphi 0, %s47
      %s50 = sphi 0, %s49
      %s64 = sphi 0, %s50
      %s70 = sphi 0, %s72
      %s73 = sphi 0, %s70
      %s74 = sphi 0, %s73
      %s90 = sphi 0, %s74
      %s94 = sphi 0, %s94
      %s96 = sphi 0, %s94
      %s97 = sphi 0, %s96
      %s111 = sphi 0, %s97
      %s115 = sphi 0, %s115
      %s117 = sphi 0, %s115
      %s118 = sphi 0, %s117
      %s132 = sphi 0, %s118
    $region4: #{tpu_custom_call.1} parent=1 // loop_header_branch
      %16 = sbr.rel (%p14) target = $region8
    $region5: #{tpu_custom_call.1} parent=1 // loop_body
      %s18 = ssub.s32 %s13, 1
      %s19 = ssub.s32 %s13, 2
      %s20 = sadd.s32 %s13, 1
      %s21 = ssub.s32 %s13, %s20
      %p22 = scmp.eq.s32.totalorder %s21, 0
      %s24 = sadd.s32 %s23, 1
      %s25 = scalar_select %p22, %s23, %s24
      %p28 = pneg %p22
      %p29 = scmp.eq.s32.totalorder %s13, 3
      %p30 = por %p28, %p29
      %p31 = scmp.ne.s32.totalorder %s23, %s26
      %p32 = scmp.eq.s32.totalorder %s13, 0
      %p33 = por %p31, %p32
      %p34 = scmp.ne.s32.totalorder %s23, %s26
      %p35 = scmp.eq.s32.totalorder %s18, 3
      %p36 = por %p34, %p35
      %p37 = scmp.ne.s32.totalorder %s26, %s27
      %p38 = scmp.eq.s32.totalorder %s18, 0
      %p39 = por %p37, %p38
      %p40 = scmp.ne.s32.totalorder %s26, %s27
      %p41 = scmp.eq.s32.totalorder %s19, 3
      %p42 = por %p40, %p41
      %p44 = scmp.ne.s32.totalorder %s27, %s43
      %p45 = scmp.eq.s32.totalorder %s19, 0
      %p46 = por %p44, %p45
      %s48 = sadd.s32 %s47, 1
      %p51 = scmp.eq.s32.totalorder %s13, 3
      %p52 = scmp.ne.s32.totalorder %s47, %s49
      %p53 = scmp.eq.s32.totalorder %s13, 0
      %p54 = por %p52, %p53
      %p55 = scmp.ne.s32.totalorder %s47, %s49
      %p56 = scmp.eq.s32.totalorder %s18, 3
      %p57 = por %p55, %p56
      %p58 = scmp.ne.s32.totalorder %s49, %s50
      %p59 = scmp.eq.s32.totalorder %s18, 0
      %p60 = por %p58, %p59
      %p61 = scmp.ne.s32.totalorder %s49, %s50
      %p62 = scmp.eq.s32.totalorder %s19, 3
      %p63 = por %p61, %p62
      %p65 = scmp.ne.s32.totalorder %s50, %s64
      %p66 = scmp.eq.s32.totalorder %s19, 0
      %p67 = por %p65, %p66
      %s68 = ssub.s32 %s13, %s20
      %p69 = scmp.eq.s32.totalorder %s68, 0
      %s71 = sadd.s32 %s70, 1
      %s72 = scalar_select %p69, %s70, %s71
      %p75 = pneg %p69
      %p76 = scmp.eq.s32.totalorder %s13, 3
      %p77 = por %p75, %p76
      %p78 = scmp.ne.s32.totalorder %s70, %s73
      %p79 = scmp.eq.s32.totalorder %s13, 0
      %p80 = por %p78, %p79
      %p81 = scmp.ne.s32.totalorder %s70, %s73
      %p82 = scmp.eq.s32.totalorder %s18, 3
      %p83 = por %p81, %p82
      %p84 = scmp.ne.s32.totalorder %s73, %s74
      %p85 = scmp.eq.s32.totalorder %s18, 0
      %p86 = por %p84, %p85
      %p87 = scmp.ne.s32.totalorder %s73, %s74
      %p88 = scmp.eq.s32.totalorder %s19, 3
      %p89 = por %p87, %p88
      %p91 = scmp.ne.s32.totalorder %s74, %s90
      %p92 = scmp.eq.s32.totalorder %s19, 0
      %p93 = por %p91, %p92
      %s95 = sadd.s32 %s94, 1
      %p98 = scmp.eq.s32.totalorder %s13, 3
      %p99 = scmp.ne.s32.totalorder %s94, %s96
      %p100 = scmp.eq.s32.totalorder %s13, 0
      %p101 = por %p99, %p100
      %p102 = scmp.ne.s32.totalorder %s94, %s96
      %p103 = scmp.eq.s32.totalorder %s18, 3
      %p104 = por %p102, %p103
      %p105 = scmp.ne.s32.totalorder %s96, %s97
      %p106 = scmp.eq.s32.totalorder %s18, 0
      %p107 = por %p105, %p106
      %p108 = scmp.ne.s32.totalorder %s96, %s97
      %p109 = scmp.eq.s32.totalorder %s19, 3
      %p110 = por %p108, %p109
      %p112 = scmp.ne.s32.totalorder %s97, %s111
      %p113 = scmp.eq.s32.totalorder %s19, 0
      %p114 = por %p112, %p113
      %s116 = sadd.s32 %s115, 1
      %p119 = scmp.eq.s32.totalorder %s13, 3
      %p120 = scmp.ne.s32.totalorder %s115, %s117
      %p121 = scmp.eq.s32.totalorder %s13, 0
      %p122 = por %p120, %p121
      %p123 = scmp.ne.s32.totalorder %s115, %s117
      %p124 = scmp.eq.s32.totalorder %s18, 3
      %p125 = por %p123, %p124
      %p126 = scmp.ne.s32.totalorder %s117, %s118
      %p127 = scmp.eq.s32.totalorder %s18, 0
      %p128 = por %p126, %p127
      %p129 = scmp.ne.s32.totalorder %s117, %s118
      %p130 = scmp.eq.s32.totalorder %s19, 3
      %p131 = por %p129, %p130
      %p133 = scmp.ne.s32.totalorder %s118, %s132
      %p134 = scmp.eq.s32.totalorder %s19, 0
      %p135 = por %p133, %p134
      %p136 = scmp.le.s32.totalorder 1, %s13
      %p137 = scmp.lt.s32.totalorder %s13, 5
      %p138 = pnand %p136, %p137
      %p139 = pneg %p138
      // Predicated region
      $region9: #{tpu_custom_call.1} parent=5 // pred_check
        _
      $region10: #{tpu_custom_call.1} parent=5 // pred_check_branch
        %141 = sbr.rel (%p138) target = $region12
      $region11: #{tpu_custom_call.1} parent=5 // pred_region
        %s142 = ssub.s32 %s13, 1
        // Predicated region
        $region13: #{tpu_custom_call.1} parent=11 // pred_check
          %p143 = pneg %p60
        $region14: #{tpu_custom_call.1} parent=11 // pred_check_branch
          %145 = sbr.rel (%p143) target = $region16
        $region15: #{tpu_custom_call.1} parent=11 // pred_region
          _
        $region16: #{tpu_custom_call.1} parent=11 // pred_fallthru
          _
      $region12: #{tpu_custom_call.1} parent=5 // pred_fallthru
        _
      %p146 = scmp.lt.s32.totalorder %s13, 4
      // Predicated region
      $region17: #{tpu_custom_call.1} parent=5 // pred_check
        %p147 = pneg %p146
      $region18: #{tpu_custom_call.1} parent=5 // pred_check_branch
        %149 = sbr.rel (%p147) target = $region20
      $region19: #{tpu_custom_call.1} parent=5 // pred_region
        // Predicated region
        $region21: #{tpu_custom_call.1} parent=19 // pred_check
          %p150 = pneg %p33
        $region22: #{tpu_custom_call.1} parent=19 // pred_check_branch
          %152 = sbr.rel (%p150) target = $region24
        $region23: #{tpu_custom_call.1} parent=19 // pred_region
          %s153 = smul.u32 16, %s13
          %p154 = scmp.lt.s32.totalorder %s153, 63
          %s155 = scalar_select %p154, %s153, 63
          %s156 = smul.addr %s155, 4
          %s157 = scalar_lea.vmem %s0, %s156
          %s158 = smul.u32 16, %s13
        $region24: #{tpu_custom_call.1} parent=19 // pred_fallthru
          _
      $region20: #{tpu_custom_call.1} parent=5 // pred_fallthru
        _
      %p159 = scmp.le.s32.totalorder 1, %s13
      %p160 = scmp.lt.s32.totalorder %s13, 5
      %p161 = pnand %p159, %p160
      %p162 = pneg %p161
      // Predicated region
      $region25: #{tpu_custom_call.1} parent=5 // pred_check
        _
      $region26: #{tpu_custom_call.1} parent=5 // pred_check_branch
        %164 = sbr.rel (%p161) target = $region28
      $region27: #{tpu_custom_call.1} parent=5 // pred_region
        %s165 = ssub.s32 %s13, 1
        %s166 = smul.u32 16, %s18
        %p167 = scmp.lt.s32.totalorder %s166, 63
        %s168 = scalar_select %p167, %s166, 63
        %s169 = smul.addr %s168, 4
        %s170 = scalar_lea.vmem %s0, %s169
        %p171 = pneg %p39
        %p172 = pneg %p36
        %p173 = pneg %p60
        %p174 = pneg %p57
        %p175 = pneg %p86
        %p176 = pneg %p83
        %s177 = smul.u32 16, %s18
        %p178 = scmp.lt.s32.totalorder %s177, 63
        %s179 = scalar_select %p178, %s177, 63
        %s180 = smul.addr %s179, 4
        %s181 = scalar_lea.vmem %s2, %s180
        %p182 = pneg %p107
        %p183 = pneg %p104
        %p184 = pneg %p128
        %p185 = pneg %p125
        %s186 = smul.u32 16, %s18
        %p187 = scmp.lt.s32.totalorder %s186, 63
        %s188 = scalar_select %p187, %s186, 63
        %s189 = smul.addr %s188, 4
        %s190 = scalar_lea.vmem %s0, %s189
        %s191 = smul.u32 16, %s18
        %s192 = smul.u32 16, %s18
        %p193 = scmp.lt.s32.totalorder %s192, 63
        %s194 = scalar_select %p193, %s192, 63
        %s195 = smul.addr %s194, 4
        %s196 = scalar_lea.vmem %s2, %s195
        %s197 = smul.u32 16, %s18
        %v199 = vld [vmem:[%s190] sm:$0xf]
        %v200 = vld [vmem:[%s190 + $0x4] sm:$0xf]
        %v201 = vld [vmem:[%s190 + $0x8] sm:$0xf]
        %v202 = vld [vmem:[%s190 + $0xc] sm:$0xf]
        %v203 = vld [vmem:[%s190 + $0x10] sm:$0xf]
        %v204 = vld [vmem:[%s190 + $0x14] sm:$0xf]
        %v205 = vld [vmem:[%s190 + $0x18] sm:$0xf]
        %v206 = vld [vmem:[%s190 + $0x1c] sm:$0xf]
        %v207 = vld [vmem:[%s190 + $0x20] sm:$0xf]
        %v208 = vld [vmem:[%s190 + $0x24] sm:$0xf]
        %v209 = vld [vmem:[%s190 + $0x28] sm:$0xf]
        %v210 = vld [vmem:[%s190 + $0x2c] sm:$0xf]
        %v211 = vld [vmem:[%s190 + $0x30] sm:$0xf]
        %v212 = vld [vmem:[%s190 + $0x34] sm:$0xf]
        %v213 = vld [vmem:[%s190 + $0x38] sm:$0xf]
        %v214 = vld [vmem:[%s190 + $0x3c] sm:$0xf]
        %v215 = vld [vmem:[%s1] sm:$0xf]
        %v216 = vld [vmem:[%s1 + $0x4] sm:$0xf]
        %v217 = vld [vmem:[%s1 + $0x8] sm:$0xf]
        %v218 = vld [vmem:[%s1 + $0xc] sm:$0xf]
        %v219 = vld [vmem:[%s1 + $0x10] sm:$0xf]
        %v220 = vld [vmem:[%s1 + $0x14] sm:$0xf]
        %v221 = vld [vmem:[%s1 + $0x18] sm:$0xf]
        %v222 = vld [vmem:[%s1 + $0x1c] sm:$0xf]
        %v223 = vld [vmem:[%s1 + $0x20] sm:$0xf]
        %v240 = vunpack.c.l.b16 %v199
        %v241 = vunpack.c.l.b16 %v200
        %v242 = vunpack.c.l.b16 %v201
        %v243 = vunpack.c.l.b16 %v202
        %v244 = vunpack.c.l.b16 %v203
        %v245 = vunpack.c.l.b16 %v204
        %v246 = vunpack.c.l.b16 %v205
        %v247 = vunpack.c.l.b16 %v206
        %v248 = vunpack.c.l.b16 %v207
        %v249 = vunpack.c.l.b16 %v208
        %v250 = vunpack.c.l.b16 %v209
        %v251 = vunpack.c.l.b16 %v210
        %v252 = vunpack.c.l.b16 %v211
        %v253 = vunpack.c.l.b16 %v212
        %v254 = vunpack.c.l.b16 %v213
        %v255 = vunpack.c.l.b16 %v214
        %v256 = vpack.c.b16 %v241, %v240
        %v257 = vpack.c.b16 %v243, %v242
        %v258 = vpack.c.b16 %v245, %v244
        %v259 = vpack.c.b16 %v247, %v246
        %v260 = vpack.c.b16 %v249, %v248
        %v261 = vpack.c.b16 %v251, %v250
        %v262 = vpack.c.b16 %v253, %v252
        %v263 = vpack.c.b16 %v255, %v254
        %v273 = vunpack.c.l.b16 %v215
        %v274 = vunpack.c.l.b16 %v216
        %v275 = vunpack.c.l.b16 %v217
        %v276 = vunpack.c.l.b16 %v218
        %v277 = vunpack.c.l.b16 %v219
        %v278 = vunpack.c.l.b16 %v220
        %v279 = vunpack.c.l.b16 %v221
        %v280 = vunpack.c.l.b16 %v222
        %v281 = vunpack.c.l.b16 %v223
        %v282 = vpack.c.b16 %v274, %v273
        %v283 = vpack.c.b16 %v276, %v275
        %v284 = vpack.c.b16 %v278, %v277
        %v285 = vpack.c.b16 %v280, %v279
        %v286 = vpack.c.b16 %v281, %v281
        %vm291 = vcmask 588800
        %v293 = vsel %vm291, %v256, 0
        %v296 = vsel %vm291, %v257, 0
        %v299 = vsel %vm291, %v258, 0
        %v302 = vsel %vm291, %v259, 0
        %v305 = vsel %vm291, %v260, 0
        %v308 = vsel %vm291, %v261, 0
        %v311 = vsel %vm291, %v262, 0
        %v314 = vsel %vm291, %v263, 0
        %vm316 = vcmask 1043456
        %v318 = vsel %vm316, %v286, 0
        %320 = vmatprep.subr.bf16.mxu0 0
        %321 = vmatpush1.bf16.msra.mxu0 %v282
        %322 = vmatprep.subr.bf16.mxu0 0
        %323 = vmatpush1.bf16.msra.mxu0 %v283
        %324 = vmatprep.subr.bf16.mxu0 0
        %325 = vmatpush1.bf16.msra.mxu0 %v284
        %326 = vmatprep.subr.bf16.mxu0 0
        %327 = vmatpush1.bf16.msra.mxu0 %v285
        %328 = vmatprep.subr.bf16.mxu0 0
        %329 = vmatpush1.bf16.msra.mxu0 %v318
        %330 = vmatprep.subr.bf16.mxu0 0
        %331 = vmatpush1.bf16.msra.mxu0 0
        %332 = vmatprep.subr.bf16.mxu0 0
        %333 = vmatpush1.bf16.msra.mxu0 0
        %334 = vmatprep.subr.bf16.mxu0 0
        %335 = vmatpush1.bf16.msra.mxu0 0
        %336 = vmatprep.subr.bf16.mxu0 0
        %337 = vmatpush1.bf16.msra.mxu0 0
        %338 = vmatprep.subr.bf16.mxu0 0
        %339 = vmatpush1.bf16.msra.mxu0 0
        %340 = vmatprep.subr.bf16.mxu0 0
        %341 = vmatpush1.bf16.msra.mxu0 0
        %342 = vmatprep.subr.bf16.mxu0 0
        %343 = vmatpush1.bf16.msra.mxu0 0
        %344 = vmatprep.subr.bf16.mxu0 0
        %345 = vmatpush1.bf16.msra.mxu0 0
        %346 = vmatprep.subr.bf16.mxu0 0
        %347 = vmatpush1.bf16.msra.mxu0 0
        %348 = vmatprep.subr.bf16.mxu0 0
        %349 = vmatpush1.bf16.msra.mxu0 0
        %350 = vmatprep.subr.bf16.mxu0 0
        %351 = vmatpush1.bf16.msra.mxu0 0
        %352 = vmatprep.mubr.bf16.mxu0 0
        %353 = vmatmul.mubr.bf16.gmra.mrb[0].mxu0 %v293
        %v354 = vpop.f32.mrb[0].mxu0
        %v355 = vadd.f32 0.0, %v354
        %v356 = vpop.f32.mrb[0].mxu0
        %v357 = vpop.f32.mrb[0].mxu0
        %v358 = vadd.f32 0.0, %v357
        %v359 = vpop.f32.mrb[0].mxu0
        %360 = vmatprep.mubr.bf16.mxu0 0
        %361 = vmatmul.mubr.bf16.gmra.mrb[0].mxu0 %v296
        %v362 = vpop.f32.mrb[0].mxu0
        %v363 = vadd.f32 0.0, %v362
        %v364 = vpop.f32.mrb[0].mxu0
        %v365 = vpop.f32.mrb[0].mxu0
        %v366 = vadd.f32 0.0, %v365
        %v367 = vpop.f32.mrb[0].mxu0
        %368 = vmatprep.mubr.bf16.mxu0 0
        %369 = vmatmul.mubr.bf16.gmra.mrb[0].mxu0 %v299
        %v370 = vpop.f32.mrb[0].mxu0
        %v371 = vadd.f32 0.0, %v370
        %v372 = vpop.f32.mrb[0].mxu0
        %v373 = vpop.f32.mrb[0].mxu0
        %v374 = vadd.f32 0.0, %v373
        %v375 = vpop.f32.mrb[0].mxu0
        %376 = vmatprep.mubr.bf16.mxu0 0
        %377 = vmatmul.mubr.bf16.gmra.mrb[0].mxu0 %v302
        %v378 = vpop.f32.mrb[0].mxu0
        %v379 = vadd.f32 0.0, %v378
        %v380 = vpop.f32.mrb[0].mxu0
        %v381 = vpop.f32.mrb[0].mxu0
        %v382 = vadd.f32 0.0, %v381
        %v383 = vpop.f32.mrb[0].mxu0
        %384 = vmatprep.mubr.bf16.mxu0 0
        %385 = vmatmul.mubr.bf16.gmra.mrb[0].mxu0 %v305
        %v386 = vpop.f32.mrb[0].mxu0
        %v387 = vadd.f32 0.0, %v386
        %v388 = vpop.f32.mrb[0].mxu0
        %v389 = vpop.f32.mrb[0].mxu0
        %v390 = vadd.f32 0.0, %v389
        %v391 = vpop.f32.mrb[0].mxu0
        %392 = vmatprep.mubr.bf16.mxu0 0
        %393 = vmatmul.mubr.bf16.gmra.mrb[0].mxu0 %v308
        %v394 = vpop.f32.mrb[0].mxu0
        %v395 = vadd.f32 0.0, %v394
        %v396 = vpop.f32.mrb[0].mxu0
        %v397 = vpop.f32.mrb[0].mxu0
        %v398 = vadd.f32 0.0, %v397
        %v399 = vpop.f32.mrb[0].mxu0
        %400 = vmatprep.mubr.bf16.mxu0 0
        %401 = vmatmul.mubr.bf16.gmra.mrb[0].mxu0 %v311
        %v402 = vpop.f32.mrb[0].mxu0
        %v403 = vadd.f32 0.0, %v402
        %v404 = vpop.f32.mrb[0].mxu0
        %v405 = vpop.f32.mrb[0].mxu0
        %v406 = vadd.f32 0.0, %v405
        %v407 = vpop.f32.mrb[0].mxu0
        %408 = vmatprep.mubr.bf16.mxu0 0
        %409 = vmatmul.mubr.bf16.gmra.mrb[0].mxu0 %v314
        %v410 = vpop.f32.mrb[0].mxu0
        %v411 = vadd.f32 0.0, %v410
        %v412 = vpop.f32.mrb[0].mxu0
        %v413 = vpop.f32.mrb[0].mxu0
        %v414 = vadd.f32 0.0, %v413
        %v415 = vpop.f32.mrb[0].mxu0
        %416 = vdwg.mxu0
        %v417 = vpack.c.bf16 %v358, %v355
        %v418 = vpack.c.bf16 %v366, %v363
        %v419 = vpack.c.bf16 %v374, %v371
        %v420 = vpack.c.bf16 %v382, %v379
        %v421 = vpack.c.bf16 %v390, %v387
        %v422 = vpack.c.bf16 %v398, %v395
        %v423 = vpack.c.bf16 %v406, %v403
        %v424 = vpack.c.bf16 %v414, %v411
        %v433 = vunpack.c.l.b16 %v417
        %v434 = vunpack.c.h.b16 %v417
        %v435 = vunpack.c.l.b16 %v418
        %v436 = vunpack.c.h.b16 %v418
        %v437 = vunpack.c.l.b16 %v419
        %v438 = vunpack.c.h.b16 %v419
        %v439 = vunpack.c.l.b16 %v420
        %v440 = vunpack.c.h.b16 %v420
        %v441 = vunpack.c.l.b16 %v421
        %v442 = vunpack.c.h.b16 %v421
        %v443 = vunpack.c.l.b16 %v422
        %v444 = vunpack.c.h.b16 %v422
        %v445 = vunpack.c.l.b16 %v423
        %v446 = vunpack.c.h.b16 %v423
        %v447 = vunpack.c.l.b16 %v424
        %v448 = vunpack.c.h.b16 %v424
        %v449 = vpack.c.b16 %v433, %v433
        %v450 = vpack.c.b16 %v434, %v434
        %v451 = vpack.c.b16 %v435, %v435
        %v452 = vpack.c.b16 %v436, %v436
        %v453 = vpack.c.b16 %v437, %v437
        %v454 = vpack.c.b16 %v438, %v438
        %v455 = vpack.c.b16 %v439, %v439
        %v456 = vpack.c.b16 %v440, %v440
        %v457 = vpack.c.b16 %v441, %v441
        %v458 = vpack.c.b16 %v442, %v442
        %v459 = vpack.c.b16 %v443, %v443
        %v460 = vpack.c.b16 %v444, %v444
        %v461 = vpack.c.b16 %v445, %v445
        %v462 = vpack.c.b16 %v446, %v446
        %v463 = vpack.c.b16 %v447, %v447
        %v464 = vpack.c.b16 %v448, %v448
        %vm481 = vcmask 60416
        %482 = vst.msk [vmem:[%s196] sm:$0xf] %vm481, %v449
        %483 = vst.msk [vmem:[%s196 + $0x4] sm:$0xf] %vm481, %v450
        %484 = vst.msk [vmem:[%s196 + $0x8] sm:$0xf] %vm481, %v451
        %485 = vst.msk [vmem:[%s196 + $0xc] sm:$0xf] %vm481, %v452
        %486 = vst.msk [vmem:[%s196 + $0x10] sm:$0xf] %vm481, %v453
        %487 = vst.msk [vmem:[%s196 + $0x14] sm:$0xf] %vm481, %v454
        %488 = vst.msk [vmem:[%s196 + $0x18] sm:$0xf] %vm481, %v455
        %489 = vst.msk [vmem:[%s196 + $0x1c] sm:$0xf] %vm481, %v456
        %490 = vst.msk [vmem:[%s196 + $0x20] sm:$0xf] %vm481, %v457
        %491 = vst.msk [vmem:[%s196 + $0x24] sm:$0xf] %vm481, %v458
        %492 = vst.msk [vmem:[%s196 + $0x28] sm:$0xf] %vm481, %v459
        %493 = vst.msk [vmem:[%s196 + $0x2c] sm:$0xf] %vm481, %v460
        %494 = vst.msk [vmem:[%s196 + $0x30] sm:$0xf] %vm481, %v461
        %495 = vst.msk [vmem:[%s196 + $0x34] sm:$0xf] %vm481, %v462
        %496 = vst.msk [vmem:[%s196 + $0x38] sm:$0xf] %vm481, %v463
        %497 = vst.msk [vmem:[%s196 + $0x3c] sm:$0xf] %vm481, %v464
        %p498 = scmp.eq.s32.totalorder %s18, 0
        // Predicated region
        $region29: #{tpu_custom_call.1} parent=27 // pred_check
          %p499 = pneg %p498
        $region30: #{tpu_custom_call.1} parent=27 // pred_check_branch
          %501 = sbr.rel (%p499) target = $region32
        $region31: #{tpu_custom_call.1} parent=27 // pred_region
          %vm502 = vcmask 57344
          %503 = vst.msk [vmem:[#allocation2] sm:$0x1] %vm502, 0.0
          %504 = vst.msk [vmem:[#allocation4] sm:$0x1] %vm502, 0.0
        $region32: #{tpu_custom_call.1} parent=27 // pred_fallthru
          _
        %v505 = vld [vmem:[#allocation2] sm:$0x1]
        %vm506 = vcmask 64512
        %v507 = vsel %vm506, %v355, 0.0
        %v508 = vsel %vm506, %v358, 0.0
        %v509 = vadd.f32 %v507, %v508
        %v510 = vsel %vm506, %v363, 0.0
        %v511 = vadd.f32 %v509, %v510
        %v512 = vsel %vm506, %v366, 0.0
        %v513 = vadd.f32 %v511, %v512
        %v514 = vsel %vm506, %v371, 0.0
        %v515 = vadd.f32 %v513, %v514
        %v516 = vsel %vm506, %v374, 0.0
        %v517 = vadd.f32 %v515, %v516
        %v518 = vsel %vm506, %v379, 0.0
        %v519 = vadd.f32 %v517, %v518
        %v520 = vsel %vm506, %v382, 0.0
        %v521 = vadd.f32 %v519, %v520
        %v522 = vsel %vm506, %v387, 0.0
        %v523 = vadd.f32 %v521, %v522
        %v524 = vsel %vm506, %v390, 0.0
        %v525 = vadd.f32 %v523, %v524
        %v526 = vsel %vm506, %v395, 0.0
        %v527 = vadd.f32 %v525, %v526
        %v528 = vsel %vm506, %v398, 0.0
        %v529 = vadd.f32 %v527, %v528
        %v530 = vsel %vm506, %v403, 0.0
        %v531 = vadd.f32 %v529, %v530
        %v532 = vsel %vm506, %v406, 0.0
        %v533 = vadd.f32 %v531, %v532
        %v534 = vsel %vm506, %v411, 0.0
        %v535 = vadd.f32 %v533, %v534
        %v536 = vsel %vm506, %v414, 0.0
        %v537 = vadd.f32 %v535, %v536
        %v538 = vrot.slane %v537, 4
        %v539 = vadd.f32 %v537, %v538
        %v540 = vrot.slane %v539, 2
        %v541 = vadd.f32 %v539, %v540
        %v542 = vrot.slane %v541, 1
        %v543 = vadd.f32 %v541, %v542
        %v544 = vadd.f32 %v505, %v543
        %vm545 = vcmask 57344
        %546 = vst.msk [vmem:[#allocation2] sm:$0x1] %vm545, %v544
        %v547 = vld [vmem:[#allocation4] sm:$0x1]
        %v548 = vmul.f32 %v355, %v355
        %v549 = vmul.f32 %v358, %v358
        %v550 = vmul.f32 %v363, %v363
        %v551 = vmul.f32 %v366, %v366
        %v552 = vmul.f32 %v371, %v371
        %v553 = vmul.f32 %v374, %v374
        %v554 = vmul.f32 %v379, %v379
        %v555 = vmul.f32 %v382, %v382
        %v556 = vmul.f32 %v387, %v387
        %v557 = vmul.f32 %v390, %v390
        %v558 = vmul.f32 %v395, %v395
        %v559 = vmul.f32 %v398, %v398
        %v560 = vmul.f32 %v403, %v403
        %v561 = vmul.f32 %v406, %v406
        %v562 = vmul.f32 %v411, %v411
        %v563 = vmul.f32 %v414, %v414
        %v564 = vsel %vm506, %v548, 0.0
        %v565 = vsel %vm506, %v549, 0.0
        %v566 = vadd.f32 %v564, %v565
        %v567 = vsel %vm506, %v550, 0.0
        %v568 = vadd.f32 %v566, %v567
        %v569 = vsel %vm506, %v551, 0.0
        %v570 = vadd.f32 %v568, %v569
        %v571 = vsel %vm506, %v552, 0.0
        %v572 = vadd.f32 %v570, %v571
        %v573 = vsel %vm506, %v553, 0.0
        %v574 = vadd.f32 %v572, %v573
        %v575 = vsel %vm506, %v554, 0.0
        %v576 = vadd.f32 %v574, %v575
        %v577 = vsel %vm506, %v555, 0.0
        %v578 = vadd.f32 %v576, %v577
        %v579 = vsel %vm506, %v556, 0.0
        %v580 = vadd.f32 %v578, %v579
        %v581 = vsel %vm506, %v557, 0.0
        %v582 = vadd.f32 %v580, %v581
        %v583 = vsel %vm506, %v558, 0.0
        %v584 = vadd.f32 %v582, %v583
        %v585 = vsel %vm506, %v559, 0.0
        %v586 = vadd.f32 %v584, %v585
        %v587 = vsel %vm506, %v560, 0.0
        %v588 = vadd.f32 %v586, %v587
        %v589 = vsel %vm506, %v561, 0.0
        %v590 = vadd.f32 %v588, %v589
        %v591 = vsel %vm506, %v562, 0.0
        %v592 = vadd.f32 %v590, %v591
        %v593 = vsel %vm506, %v563, 0.0
        %v594 = vadd.f32 %v592, %v593
        %v595 = vrot.slane %v594, 4
        %v596 = vadd.f32 %v594, %v595
        %v597 = vrot.slane %v596, 2
        %v598 = vadd.f32 %v596, %v597
        %v599 = vrot.slane %v598, 1
        %v600 = vadd.f32 %v598, %v599
        %v601 = vadd.f32 %v547, %v600
        %602 = vst.msk [vmem:[#allocation4] sm:$0x1] %vm545, %v601
        %s603 = smul.u32 16, %s18
        %p604 = scmp.lt.s32.totalorder %s603, 63
        %s605 = scalar_select %p604, %s603, 63
        %s606 = smul.addr %s605, 4
        %s607 = scalar_lea.vmem %s2, %s606
        // Predicated region
        $region33: #{tpu_custom_call.1} parent=27 // pred_check
          %p608 = pneg %p83
        $region34: #{tpu_custom_call.1} parent=27 // pred_check_branch
          %610 = sbr.rel (%p608) target = $region36
        $region35: #{tpu_custom_call.1} parent=27 // pred_region
          %s611 = smul.u32 16, %s18
        $region36: #{tpu_custom_call.1} parent=27 // pred_fallthru
          _
        // Predicated region
        $region37: #{tpu_custom_call.1} parent=27 // pred_check
          %p612 = pneg %p104
        $region38: #{tpu_custom_call.1} parent=27 // pred_check_branch
          %614 = sbr.rel (%p612) target = $region40
        $region39: #{tpu_custom_call.1} parent=27 // pred_region
          %s616 = ssub.s32 16, 16
          %617 = vsyncadd [#allocation3], %s616
          %s619 = sshll.u32 [#allocation2], 4
          %s620 = int_to_ptr.vmem [resolvable:$true] %s619
          %622 = dma.vmem_to_hbm [thread:$0]  %s620, 16, %s3, [#allocation3]
        $region40: #{tpu_custom_call.1} parent=27 // pred_fallthru
          _
        // Predicated region
        $region41: #{tpu_custom_call.1} parent=27 // pred_check
          %p623 = pneg %p125
        $region42: #{tpu_custom_call.1} parent=27 // pred_check_branch
          %625 = sbr.rel (%p623) target = $region44
        $region43: #{tpu_custom_call.1} parent=27 // pred_region
          %s627 = ssub.s32 16, 16
          %628 = vsyncadd [#allocation5], %s627
          %s630 = sshll.u32 [#allocation4], 4
          %s631 = int_to_ptr.vmem [resolvable:$true] %s630
          %633 = dma.vmem_to_hbm [thread:$0]  %s631, 16, %s4, [#allocation5]
        $region44: #{tpu_custom_call.1} parent=27 // pred_fallthru
          _
        // Predicated region
        $region45: #{tpu_custom_call.1} parent=27 // pred_check
          %p634 = pneg %p104
        $region46: #{tpu_custom_call.1} parent=27 // pred_check_branch
          %636 = sbr.rel (%p634) target = $region48
        $region47: #{tpu_custom_call.1} parent=27 // pred_region
          %637 = dma.done [#allocation3], 16
        $region48: #{tpu_custom_call.1} parent=27 // pred_fallthru
          _
        // Predicated region
        $region49: #{tpu_custom_call.1} parent=27 // pred_check
          %p638 = pneg %p125
        $region50: #{tpu_custom_call.1} parent=27 // pred_check_branch
          %640 = sbr.rel (%p638) target = $region52
        $region51: #{tpu_custom_call.1} parent=27 // pred_region
          %641 = dma.done [#allocation5], 16
        $region52: #{tpu_custom_call.1} parent=27 // pred_fallthru
          _
      $region28: #{tpu_custom_call.1} parent=5 // pred_fallthru
        _
      %p642 = scmp.le.s32.totalorder 2, %s13
      // Predicated region
      $region53: #{tpu_custom_call.1} parent=5 // pred_check
        %p643 = pneg %p642
      $region54: #{tpu_custom_call.1} parent=5 // pred_check_branch
        %645 = sbr.rel (%p643) target = $region56
      $region55: #{tpu_custom_call.1} parent=5 // pred_region
        %s646 = ssub.s32 %s13, 2
        // Predicated region
        $region57: #{tpu_custom_call.1} parent=55 // pred_check
          %p647 = pneg %p89
        $region58: #{tpu_custom_call.1} parent=55 // pred_check_branch
          %649 = sbr.rel (%p647) target = $region60
        $region59: #{tpu_custom_call.1} parent=55 // pred_region
          %s650 = smul.u32 16, %s19
          %p651 = scmp.lt.s32.totalorder %s650, 63
          %s652 = scalar_select %p651, %s650, 63
          %s653 = smul.addr %s652, 4
          %s654 = scalar_lea.vmem %s2, %s653
        $region60: #{tpu_custom_call.1} parent=55 // pred_fallthru
          _
      $region56: #{tpu_custom_call.1} parent=5 // pred_fallthru
        _
    $region6: #{tpu_custom_call.1} parent=1 // loop_footer
      %s17 = sadd.s32 1, %s13
    $region7: #{tpu_custom_call.1} parent=1 // loop_footer_branch
      %12 = sbr.rel target = $region3
    $region8: #{tpu_custom_call.1} parent=1 // loop_exit
      _
    %655 = vsyncpa [#allocation3], 1
    %s656 = scalar_lea.sflag [#allocation3], 1
    %657 = vsyncpa %s656, 1
    %658 = vsyncpa [#allocation5], 1

</llo_original>
